<compile_context>
chip_gen: v5e
topology: v5e:2x2
jax: 0.10.0
libtpu: 0.0.40
codegen_flags: <defaults>
</compile_context>

<pallas_src>
import jax
import jax.numpy as jnp
from jax.experimental import pallas as pl
from jax.experimental.pallas import tpu as pltpu


def _maxmin_kernel(x_ref, o_ref):
    # Block shape: (1, 2, TC, THW).  The two halves are a major axis.
    a = x_ref[0, 0]
    b = x_ref[0, 1]
    o_ref[0, 0] = jnp.maximum(a, b)
    o_ref[0, 1] = jnp.minimum(a, b)


def _round_up(x, m):
    return ((x + m - 1) // m) * m


def _largest_divisor_leq(n, cap):
    cap = max(1, min(n, cap))
    for d in range(cap, 0, -1):
        if n % d == 0:
            return d
    return 1


def maxmin(x):
    """MaxMin over axis=1 (channel axis), matching the PyTorch module.

    x: (N, C, H, W) with C even.  Returns same shape/dtype.
    """
    N, C, H, W = x.shape
    assert C % 2 == 0, "MaxMin requires an even number of channels"
    half = C // 2
    hw = H * W

    itemsize = jnp.dtype(x.dtype).itemsize
    # Sublane multiple for the second-minor axis (f32: 8, bf16: 16, int8: 32).
    sub = {4: 8, 2: 16, 1: 32}.get(itemsize, 8)

    # Free reshape (contiguous NCHW): the half-split becomes a major axis.
    x2 = x.reshape(N, 2, half, hw)

    # Pad to tile-aligned extents only when needed (keeps stores unmasked).
    half_p = _round_up(half, sub)
    hw_p = _round_up(hw, 128)
    padded = (half_p != half) or (hw_p != hw)
    if padded:
        x2 = jnp.pad(x2, ((0, 0), (0, 0), (0, half_p - half), (0, hw_p - hw)))

    # Lane tile: multiple of 128, <= 2048 lanes, dividing hw_p evenly.
    thw = 128 * _largest_divisor_leq(hw_p // 128, 16)
    # Channel-half tile: multiple of `sub`, dividing half_p evenly, sized so
    # one block stays <= ~2 MiB (v7x-safe with double buffering of in + out).
    target_block_bytes = 2 * 1024 * 1024
    tc_cap = max(sub, target_block_bytes // (2 * thw * itemsize))
    tc = sub * _largest_divisor_leq(half_p // sub, max(1, tc_cap // sub))

    grid = (N, half_p // tc, hw_p // thw)

    out = pl.pallas_call(
        _maxmin_kernel,
        out_shape=jax.ShapeDtypeStruct((N, 2, half_p, hw_p), x.dtype),
        grid_spec=pltpu.PrefetchScalarGridSpec(
            num_scalar_prefetch=0,
            grid=grid,
            in_specs=[
                pl.BlockSpec((1, 2, tc, thw), lambda n, c, s: (n, 0, c, s)),
            ],
            out_specs=pl.BlockSpec((1, 2, tc, thw), lambda n, c, s: (n, 0, c, s)),
        ),
        compiler_params=pltpu.CompilerParams(
            dimension_semantics=("parallel", "parallel", "parallel"),
        ),
    )(x2)

    if padded:
        out = out[:, :, :half, :hw]
    return out.reshape(N, C, H, W)


def maxmin_reference(x):
    half = x.shape[1] // 2
    a, b = x[:, :half], x[:, half:]
    return jnp.concatenate([jnp.maximum(a, b), jnp.minimum(a, b)], axis=1)


if __name__ == "__main__":
    key = jax.random.PRNGKey(0)
    x = jax.random.normal(key, (2, 4, 16, 16), dtype=jnp.float32)

    y = maxmin(x)
    jax.block_until_ready(y)

    y_ref = maxmin_reference(x)
    assert y.shape == x.shape and y.dtype == x.dtype
    assert jnp.allclose(y, y_ref), "Pallas MaxMin mismatch vs reference"

    print("KERNEL_OK")
</pallas_src>

<mosaic_0001>
module attributes {stable_mosaic.version = 11 : i64} {
  func.func @_maxmin_kernel(%arg0: i32, %arg1: i32, %arg2: i32, %arg3: memref<1x2x8x256xf32, #tpu.memory_space<vmem>>, %arg4: memref<1x2x8x256xf32, #tpu.memory_space<vmem>>) attributes {dimension_semantics = [#tpu.dimension_semantics<parallel>, #tpu.dimension_semantics<parallel>, #tpu.dimension_semantics<parallel>], iteration_bounds = array<i64: 2, 1, 1>, scalar_prefetch = 0 : i64, scratch_operands = 0 : i64, tpu.core_type = #tpu.core_type<tc>, window_params = [{transform_indices = @transform_0, window_bounds = array<i64: 1, 2, 8, 256>}, {transform_indices = @transform_1, window_bounds = array<i64: 1, 2, 8, 256>}]} {
    %c0 = arith.constant 0 : index
    %c0_0 = arith.constant 0 : index
    %c0_1 = arith.constant 0 : index
    %c0_2 = arith.constant 0 : index
    %0 = vector.load %arg3[%c0, %c0_0, %c0_1, %c0_2] : memref<1x2x8x256xf32, #tpu.memory_space<vmem>>, vector<1x1x8x256xf32>
    %1 = vector.shape_cast %0 : vector<1x1x8x256xf32> to vector<8x256xf32>
    %c0_3 = arith.constant 0 : index
    %c1 = arith.constant 1 : index
    %c0_4 = arith.constant 0 : index
    %c0_5 = arith.constant 0 : index
    %2 = vector.load %arg3[%c0_3, %c1, %c0_4, %c0_5] : memref<1x2x8x256xf32, #tpu.memory_space<vmem>>, vector<1x1x8x256xf32>
    %3 = vector.shape_cast %2 : vector<1x1x8x256xf32> to vector<8x256xf32>
    %4 = arith.maximumf %1, %3 : vector<8x256xf32>
    %c0_6 = arith.constant 0 : index
    %c0_7 = arith.constant 0 : index
    %c0_8 = arith.constant 0 : index
    %c0_9 = arith.constant 0 : index
    %5 = vector.load %arg4[%c0_6, %c0_7, %c0_8, %c0_9] : memref<1x2x8x256xf32, #tpu.memory_space<vmem>>, vector<1x1x8x256xf32>
    %6 = vector.shape_cast %5 : vector<1x1x8x256xf32> to vector<8x256xf32>
    %7 = vector.shape_cast %4 : vector<8x256xf32> to vector<1x1x8x256xf32>
    tpu.vector_store %arg4[%c0_6, %c0_7, %c0_8, %c0_9], %7 {strides = array<i32>} : memref<1x2x8x256xf32, #tpu.memory_space<vmem>>, vector<1x1x8x256xf32>,
    %8 = arith.minimumf %1, %3 : vector<8x256xf32>
    %c0_10 = arith.constant 0 : index
    %c1_11 = arith.constant 1 : index
    %c0_12 = arith.constant 0 : index
    %c0_13 = arith.constant 0 : index
    %9 = vector.load %arg4[%c0_10, %c1_11, %c0_12, %c0_13] : memref<1x2x8x256xf32, #tpu.memory_space<vmem>>, vector<1x1x8x256xf32>
    %10 = vector.shape_cast %9 : vector<1x1x8x256xf32> to vector<8x256xf32>
    %11 = vector.shape_cast %8 : vector<8x256xf32> to vector<1x1x8x256xf32>
    tpu.vector_store %arg4[%c0_10, %c1_11, %c0_12, %c0_13], %11 {strides = array<i32>} : memref<1x2x8x256xf32, #tpu.memory_space<vmem>>, vector<1x1x8x256xf32>,
    return
  }
  func.func @transform_0(%arg0: i32, %arg1: i32, %arg2: i32) -> (i32, i32, i32, i32) {
    %c0_i32 = arith.constant 0 : i32
    %c0_i32_0 = arith.constant 0 : i32
    return %arg0, %c0_i32, %arg1, %arg2 : i32, i32, i32, i32
  }
  func.func @transform_1(%arg0: i32, %arg1: i32, %arg2: i32) -> (i32, i32, i32, i32) {
    %c0_i32 = arith.constant 0 : i32
    %c0_i32_0 = arith.constant 0 : i32
    return %arg0, %c0_i32, %arg1, %arg2 : i32, i32, i32, i32
  }
}

</mosaic_0001>

<llo_original>
// kernel: tpu_custom_call.1
$region0: #{tpu_custom_call.1}
  #allocation0 [shape = 'u32[]', space=smem, size = 0x4, offset = 0x4, fixed_abs, tag = 'smem constant byte address 0x4 - core index']
  #allocation1 [shape = 'u32[72,128]{1,0:T(1,128)}', space=vmem, size = 0x9000, scoped, tag = 'internal scratch']
  %s0 = inlined_call_operand.hbm [shape: f32[2,2,8,256], index: 0, kind: input, shape index: {}]
  %s1 = inlined_call_operand.hbm [shape: f32[2,2,8,256], index: 1, kind: output, shape index: {}]
  %s2 = sld [smem:[#allocation0]]
  $region41: #{tpu_custom_call.1} parent=0
    _
  %s4 = ssub.s32 1, %s2
  %s5 = scalar_select 0, %s4, %s2
  $region1: #{tpu_custom_call.1} parent=0
    #allocation2 [shape = 'u8[32768]{0}', space=vmem, size = 0x8000, scoped, tag = 'input window, operand 0']
    #allocation3 [shape = 's32[2]{0}', space=sflag, size = 0x8, scoped, tag = 'scoped memory for tpu_custom_call.1']
    #allocation4 [shape = 's32[2]{0}', space=sflag, size = 0x8, scoped, tag = 'scoped memory for tpu_custom_call.1']
    #allocation5 [shape = 'u8[32768]{0}', space=vmem, size = 0x8000, scoped, tag = 'output window, operand 0']
    %6 = vsyncpa [#allocation3], 0
    %s7 = scalar_lea.sflag [#allocation3], 1
    %8 = vsyncpa %s7, 0
    %9 = vsyncpa [#allocation4], 0
    %s10 = scalar_lea.sflag [#allocation4], 1
    %11 = vsyncpa %s10, 0
    loop: start=0, step=1, limit=4
    $region2: #{tpu_custom_call.1} parent=1 // loop_pre_header
      _
    $region3: #{tpu_custom_call.1} parent=1 // loop_header
      %s13 = sphi 0, %s17
      %p14 = scmp.ge.s32.totalorder %s13, 4
      %s20 = sphi 0, %s39
      %s21 = sphi 0, %s35
      %s22 = sphi 0, %s31
      %s23 = sphi 0, %s20
      %s24 = sphi 0, %s21
      %s25 = sphi 0, %s22
      %s26 = sphi 0, %s23
      %s27 = sphi 0, %s24
      %s28 = sphi 0, %s25
      %s46 = sphi 0, %s48
      %s49 = sphi 0, %s46
      %s50 = sphi 0, %s49
      %s66 = sphi 0, %s50
      %s76 = sphi 0, %s78
      %s79 = sphi 0, %s76
      %s80 = sphi 0, %s79
      %s96 = sphi 0, %s80
    $region4: #{tpu_custom_call.1} parent=1 // loop_header_branch
      %16 = sbr.rel (%p14) target = $region8
    $region5: #{tpu_custom_call.1} parent=1 // loop_body
      %s18 = ssub.s32 %s13, 1
      %s19 = ssub.s32 %s13, 2
      %s29 = sadd.s32 1, %s22
      %p30 = scmp.ge.s32.totalorder %s29, 1
      %s31 = scalar_select %p30, 0, %s29
      %s32 = sadd.s32 1, %s21
      %s33 = scalar_select %p30, %s32, %s21
      %p34 = scmp.ge.s32.totalorder %s33, 1
      %s35 = scalar_select %p34, 0, %s33
      %s36 = sadd.s32 1, %s20
      %s37 = scalar_select %p34, %s36, %s20
      %p38 = scmp.ge.s32.totalorder %s37, 2
      %s39 = scalar_select %p38, 0, %s37
      %s40 = ssub.s32 %s20, %s39
      %s41 = ssub.s32 %s21, %s35
      %s42 = sor.u32 %s40, %s41
      %s43 = ssub.s32 %s22, %s31
      %s44 = sor.u32 %s42, %s43
      %p45 = scmp.eq.s32.totalorder %s44, 0
      %s47 = sadd.s32 %s46, 1
      %s48 = scalar_select %p45, %s46, %s47
      %p51 = pneg %p45
      %p52 = scmp.eq.s32.totalorder %s13, 1
      %p53 = por %p51, %p52
      %p54 = scmp.ne.s32.totalorder %s46, %s49
      %p55 = scmp.eq.s32.totalorder %s13, 0
      %p56 = por %p54, %p55
      %p57 = scmp.ne.s32.totalorder %s46, %s49
      %p58 = scmp.eq.s32.totalorder %s18, 1
      %p59 = por %p57, %p58
      %p60 = scmp.ne.s32.totalorder %s49, %s50
      %p61 = scmp.eq.s32.totalorder %s18, 0
      %p62 = por %p60, %p61
      %p63 = scmp.ne.s32.totalorder %s49, %s50
      %p64 = scmp.eq.s32.totalorder %s19, 1
      %p65 = por %p63, %p64
      %p67 = scmp.ne.s32.totalorder %s50, %s66
      %p68 = scmp.eq.s32.totalorder %s19, 0
      %p69 = por %p67, %p68
      %s70 = ssub.s32 %s20, %s39
      %s71 = ssub.s32 %s21, %s35
      %s72 = sor.u32 %s70, %s71
      %s73 = ssub.s32 %s22, %s31
      %s74 = sor.u32 %s72, %s73
      %p75 = scmp.eq.s32.totalorder %s74, 0
      %s77 = sadd.s32 %s76, 1
      %s78 = scalar_select %p75, %s76, %s77
      %p81 = pneg %p75
      %p82 = scmp.eq.s32.totalorder %s13, 1
      %p83 = por %p81, %p82
      %p84 = scmp.ne.s32.totalorder %s76, %s79
      %p85 = scmp.eq.s32.totalorder %s13, 0
      %p86 = por %p84, %p85
      %p87 = scmp.ne.s32.totalorder %s76, %s79
      %p88 = scmp.eq.s32.totalorder %s18, 1
      %p89 = por %p87, %p88
      %p90 = scmp.ne.s32.totalorder %s79, %s80
      %p91 = scmp.eq.s32.totalorder %s18, 0
      %p92 = por %p90, %p91
      %p93 = scmp.ne.s32.totalorder %s79, %s80
      %p94 = scmp.eq.s32.totalorder %s19, 1
      %p95 = por %p93, %p94
      %p97 = scmp.ne.s32.totalorder %s80, %s96
      %p98 = scmp.eq.s32.totalorder %s19, 0
      %p99 = por %p97, %p98
      %p100 = scmp.le.s32.totalorder 1, %s13
      %p101 = scmp.lt.s32.totalorder %s13, 3
      %p102 = pnand %p100, %p101
      %p103 = pneg %p102
      // Predicated region
      $region9: #{tpu_custom_call.1} parent=5 // pred_check
        _
      $region10: #{tpu_custom_call.1} parent=5 // pred_check_branch
        %105 = sbr.rel (%p102) target = $region12
      $region11: #{tpu_custom_call.1} parent=5 // pred_region
        %s106 = ssub.s32 %s13, 1
      $region12: #{tpu_custom_call.1} parent=5 // pred_fallthru
        _
      %p107 = scmp.lt.s32.totalorder %s13, 2
      // Predicated region
      $region13: #{tpu_custom_call.1} parent=5 // pred_check
        %p108 = pneg %p107
      $region14: #{tpu_custom_call.1} parent=5 // pred_check_branch
        %110 = sbr.rel (%p108) target = $region16
      $region15: #{tpu_custom_call.1} parent=5 // pred_region
        // Predicated region
        $region17: #{tpu_custom_call.1} parent=15 // pred_check
          %p111 = pneg %p56
        $region18: #{tpu_custom_call.1} parent=15 // pred_check_branch
          %113 = sbr.rel (%p111) target = $region20
        $region19: #{tpu_custom_call.1} parent=15 // pred_region
          %s114 = sand.u32 %s46, 1
          %s115 = scalar_lea.sflag [#allocation3], %s114
          %s116 = sand.u32 %s46, 1
          %s117 = smul.addr %s116, 32
          %s118 = scalar_lea.vmem [#allocation2], %s117
          %s119 = smul.u32 2, %s22
          %121 = vsyncadd %s115, 0
          %s122 = smul.addr %s21, 2
          %s123 = sadd.s32 %s119, %s122
          %s124 = smul.addr %s20, 4
          %s125 = sadd.s32 %s123, %s124
          %s126 = smul.addr %s125, 8
          %s127 = scalar_lea.hbm %s0, %s126
          %s128 = sshll.u32 %s127, 4
          %s129 = int_to_ptr.hbm [resolvable:$true] %s128
          %s130 = sshll.u32 %s118, 4
          %s131 = int_to_ptr.vmem [resolvable:$true] %s130
          %136 = dma.hbm_to_vmem [thread:$0]  %s129, 512, %s131, %s115, 256, 256, 16
        $region20: #{tpu_custom_call.1} parent=15 // pred_fallthru
          _
      $region16: #{tpu_custom_call.1} parent=5 // pred_fallthru
        _
      %p137 = scmp.le.s32.totalorder 1, %s13
      %p138 = scmp.lt.s32.totalorder %s13, 3
      %p139 = pnand %p137, %p138
      %p140 = pneg %p139
      // Predicated region
      $region21: #{tpu_custom_call.1} parent=5 // pred_check
        _
      $region22: #{tpu_custom_call.1} parent=5 // pred_check_branch
        %142 = sbr.rel (%p139) target = $region24
      $region23: #{tpu_custom_call.1} parent=5 // pred_region
        %s143 = ssub.s32 %s13, 1
        %s144 = sand.u32 %s49, 1
        %s145 = scalar_lea.sflag [#allocation3], %s144
        %s146 = sand.u32 %s49, 1
        %s147 = smul.addr %s146, 32
        %s148 = scalar_lea.vmem [#allocation2], %s147
        // Predicated region
        $region25: #{tpu_custom_call.1} parent=23 // pred_check
          %p149 = pneg %p62
        $region26: #{tpu_custom_call.1} parent=23 // pred_check_branch
          %151 = sbr.rel (%p149) target = $region28
        $region27: #{tpu_custom_call.1} parent=23 // pred_region
          %153 = dma.done %s145, 512
        $region28: #{tpu_custom_call.1} parent=23 // pred_fallthru
          _
        %s154 = sand.u32 %s49, 1
        %s155 = scalar_lea.sflag [#allocation3], %s154
        %s156 = sand.u32 %s49, 1
        %s157 = smul.addr %s156, 32
        %s158 = scalar_lea.vmem [#allocation2], %s157
        %p159 = pneg %p62
        %p160 = pneg %p59
        %p161 = pneg %p92
        %p162 = pneg %p89
        %s163 = sand.u32 %s79, 1
        %s164 = scalar_lea.sflag [#allocation4], %s163
        %s165 = sand.u32 %s79, 1
        %s166 = smul.addr %s165, 32
        %s167 = scalar_lea.vmem [#allocation5], %s166
        %s168 = smul.u32 2, %s25
        %s169 = smul.u32 2, %s25
        %v170 = vld [vmem:[%s148] sm:$0xff]
        %v171 = vld [vmem:[%s148 + $0x8] sm:$0xff]
        %s172 = scalar_lea.vmem %s148, 16 [#allocation2]
        %v173 = vld [vmem:[%s172] sm:$0xff]
        %v174 = vld [vmem:[%s172 + $0x8] sm:$0xff]
        %v175 = vmax.f32 %v170, %v173
        %v176 = vmax.f32 %v171, %v174
        %177 = vst [vmem:[%s167] sm:$0xff] %v175
        %178 = vst [vmem:[%s167 + $0x8] sm:$0xff] %v176
        %v179 = vmin.f32 %v170, %v173
        %v180 = vmin.f32 %v171, %v174
        %s181 = scalar_lea.vmem %s167, 16 [#allocation5]
        %182 = vst [vmem:[%s181] sm:$0xff] %v179
        %183 = vst [vmem:[%s181 + $0x8] sm:$0xff] %v180
        %s184 = sand.u32 %s79, 1
        %s185 = scalar_lea.sflag [#allocation4], %s184
        %s186 = sand.u32 %s79, 1
        %s187 = smul.addr %s186, 32
        %s188 = scalar_lea.vmem [#allocation5], %s187
        // Predicated region
        $region29: #{tpu_custom_call.1} parent=23 // pred_check
          %p189 = pneg %p89
        $region30: #{tpu_custom_call.1} parent=23 // pred_check_branch
          %191 = sbr.rel (%p189) target = $region32
        $region31: #{tpu_custom_call.1} parent=23 // pred_region
          %s192 = smul.u32 2, %s25
          %194 = vsyncadd %s185, 0
          %s195 = smul.addr %s24, 2
          %s196 = sadd.s32 %s192, %s195
          %s197 = smul.addr %s23, 4
          %s198 = sadd.s32 %s196, %s197
          %s199 = smul.addr %s198, 8
          %s200 = scalar_lea.hbm %s1, %s199
          %s201 = sshll.u32 %s188, 4
          %s202 = int_to_ptr.vmem [resolvable:$true] %s201
          %s203 = sshll.u32 %s200, 4
          %s204 = int_to_ptr.hbm [resolvable:$true] %s203
          %209 = dma.vmem_to_hbm [thread:$0]  %s202, 512, %s204, %s185, 256, 256, 16
        $region32: #{tpu_custom_call.1} parent=23 // pred_fallthru
          _
      $region24: #{tpu_custom_call.1} parent=5 // pred_fallthru
        _
      %p210 = scmp.le.s32.totalorder 2, %s13
      // Predicated region
      $region33: #{tpu_custom_call.1} parent=5 // pred_check
        %p211 = pneg %p210
      $region34: #{tpu_custom_call.1} parent=5 // pred_check_branch
        %213 = sbr.rel (%p211) target = $region36
      $region35: #{tpu_custom_call.1} parent=5 // pred_region
        %s214 = ssub.s32 %s13, 2
        // Predicated region
        $region37: #{tpu_custom_call.1} parent=35 // pred_check
          %p215 = pneg %p95
        $region38: #{tpu_custom_call.1} parent=35 // pred_check_branch
          %217 = sbr.rel (%p215) target = $region40
        $region39: #{tpu_custom_call.1} parent=35 // pred_region
          %s218 = sand.u32 %s80, 1
          %s219 = scalar_lea.sflag [#allocation4], %s218
          %s220 = sand.u32 %s80, 1
          %s221 = smul.addr %s220, 32
          %s222 = scalar_lea.vmem [#allocation5], %s221
          %224 = dma.done %s219, 512
        $region40: #{tpu_custom_call.1} parent=35 // pred_fallthru
          _
      $region36: #{tpu_custom_call.1} parent=5 // pred_fallthru
        _
    $region6: #{tpu_custom_call.1} parent=1 // loop_footer
      %s17 = sadd.s32 1, %s13
    $region7: #{tpu_custom_call.1} parent=1 // loop_footer_branch
      %12 = sbr.rel target = $region3
    $region8: #{tpu_custom_call.1} parent=1 // loop_exit
      _
    %225 = vsyncpa [#allocation3], 1
    %s226 = scalar_lea.sflag [#allocation3], 1
    %227 = vsyncpa %s226, 1
    %228 = vsyncpa [#allocation4], 1
    %s229 = scalar_lea.sflag [#allocation4], 1
    %230 = vsyncpa %s229, 1

</llo_original>
